<compile_context>
chip_gen: v5e
topology: v5e:2x2
jax: 0.10.0
libtpu: 0.0.40
codegen_flags: <defaults>
</compile_context>

<pallas_src>
import functools
from typing import Tuple

import numpy as np
import jax
import jax.numpy as jnp
from jax.experimental import pallas as pl
from jax.experimental.pallas import tpu as pltpu


def _round_up(x: int, m: int) -> int:
    return ((x + m - 1) // m) * m


# -----------------------------------------------------------------------------
# Kernel 1: descriptor projection + L2 normalization (bf16 output only)
# -----------------------------------------------------------------------------

def _desc_kernel(patches_ref, w_ref, desc_ref):
    """(tmd, Kp) bf16 patches @ (Kp, Dp) bf16 W -> f32 acc, L2-normalize, bf16 out."""
    x = patches_ref[...]                                     # (tmd, Kp) bf16
    w = w_ref[...]                                           # (Kp, Dp) bf16
    d = jnp.dot(x, w, preferred_element_type=jnp.float32)    # (tmd, Dp) f32
    sq = jnp.sum(d * d, axis=-1, keepdims=True)              # (tmd, 1)
    dn = d * jax.lax.rsqrt(sq + 1e-8)                        # f32 VPU/EUP math
    desc_ref[...] = dn.astype(jnp.bfloat16)


def compute_descriptors(patches: jnp.ndarray, w: jnp.ndarray) -> jnp.ndarray:
    """patches (N, K) f32, w (Kp, Dp) f32 (K zero-padded to Kp) -> bf16 (N, Dp)."""
    n, k = patches.shape
    kp, dp = w.shape
    tmd = min(1024, _round_up(max(n, 1), 8))                 # larger row tile
    n_pad = _round_up(max(n, 1), tmd)
    p_b = jnp.pad(patches.astype(jnp.bfloat16),
                  ((0, n_pad - n), (0, kp - k)))              # pad rows + K
    w_b = w.astype(jnp.bfloat16)

    # explicit VMEM budget (double-buffered tiles + resident W), v7x-safe
    est = 2 * (tmd * kp * 2) + 2 * (kp * dp * 2) + 2 * (tmd * dp * 2)
    vmem_limit = int(min(32 << 20, max(2 * est + (2 << 20), 8 << 20)))

    desc = pl.pallas_call(
        _desc_kernel,
        out_shape=jax.ShapeDtypeStruct((n_pad, dp), jnp.bfloat16),
        grid=(n_pad // tmd,),
        in_specs=[pl.BlockSpec((tmd, kp), lambda i: (i, 0)),
                  pl.BlockSpec((kp, dp), lambda i: (0, 0))],   # W resident
        out_specs=pl.BlockSpec((tmd, dp), lambda i: (i, 0)),
        compiler_params=pltpu.CompilerParams(
            dimension_semantics=("parallel",),
            vmem_limit_bytes=vmem_limit),
    )(p_b, w_b)
    return desc[:n]


# -----------------------------------------------------------------------------
# Kernel 2: tiled similarity + online row-argmax (one direction per call)
# -----------------------------------------------------------------------------

def _nn_kernel(a_ref, b_ref, nn_ref, max_ref, *, tn, nj, pad, resident):
    """For each row of the current A tile, online argmax over B rows (axis j)."""
    j = pl.program_id(1)
    tm = a_ref.shape[0]

    if resident:
        # B fully resident in VMEM; take the j-th 128-aligned slice.
        b = b_ref[pl.ds(pl.multiple_of(j * tn, 128), tn), :]
    else:
        b = b_ref[...]                                        # streamed (tn, Dp) tile

    # bf16 tiles -> f32 accumulator, NT contraction (no explicit transpose).
    sim = jax.lax.dot_general(
        a_ref[...], b,
        dimension_numbers=(((1,), (1,)), ((), ())),
        preferred_element_type=jnp.float32)                   # (tm, tn) f32

    col_local = jax.lax.broadcasted_iota(jnp.int32, (tm, tn), 1)  # grid-invariant
    big_idx = jnp.int32(2 ** 30)
    neg_inf = jnp.float32(-jnp.inf)

    def _update(s):
        tmax = jnp.max(s, axis=1, keepdims=True)                           # (tm,1)
        tidx = (jnp.min(jnp.where(s == tmax, col_local, big_idx),
                        axis=1, keepdims=True)
                + j * tn)                                                  # (tm,1)

        @pl.when(j == 0)
        def _():
            max_ref[...] = tmax
            nn_ref[...] = tidx

        @pl.when(j > 0)
        def _():
            better = tmax > max_ref[...]   # strict > keeps first occurrence
            nn_ref[...] = jnp.where(better, tidx, nn_ref[...])
            max_ref[...] = jnp.maximum(tmax, max_ref[...])

    if pad == 0:
        _update(sim)                       # no padded columns anywhere
    else:
        # Only the last j tile carries padded columns: mask there, raw elsewhere.
        @pl.when(j == nj - 1)
        def _():
            valid = col_local < (tn - pad)                    # static local mask
            _update(jnp.where(valid, sim, neg_inf))

        @pl.when(j < nj - 1)
        def _():
            _update(sim)


def nearest_neighbors(a_b16: jnp.ndarray, b_b16: jnp.ndarray,
                      *, tn_cap: int = 512) -> jnp.ndarray:
    """bf16 (Na, Dp), (Nb, Dp) -> nn (Na,) int32 : argmax_j <a_i, b_j>."""
    n_rows, dp = a_b16.shape
    n_cols = b_b16.shape[0]

    tm = 128                                                   # fits 64-vreg file
    tn = min(tn_cap, _round_up(max(n_cols, 1), 128))
    n_rows_p = _round_up(max(n_rows, 1), tm)
    n_cols_p = _round_up(max(n_cols, 1), tn)      # n_cols_p - n_cols < tn (edge tile
                                                  # keeps >=1 valid column: indices in range)
    a_p = jnp.pad(a_b16, ((0, n_rows_p - n_rows), (0, 0)))
    b_p = jnp.pad(b_b16, ((0, n_cols_p - n_cols), (0, 0)))

    nj = n_cols_p // tn
    # Keep B VMEM-resident when (double-buffered) it stays well under budget;
    # removes per-row-tile re-streaming of B from HBM.
    resident = (2 * n_cols_p * dp * 2) <= (8 << 20)
    if resident:
        b_spec = pl.BlockSpec((n_cols_p, dp), lambda i, j: (0, 0))
    else:
        b_spec = pl.BlockSpec((tn, dp), lambda i, j: (j, 0))

    kernel = functools.partial(_nn_kernel, tn=tn, nj=nj,
                               pad=n_cols_p - n_cols, resident=resident)

    # Explicit VMEM budget (re-derived for v7x's 64 MiB physical / 32 MiB scoped).
    est = 2 * (tm * dp * 2)                                     # A tiles (dbl-buf)
    est += (2 * n_cols_p * dp * 2) if resident else (2 * tn * dp * 2)
    est += 2 * (tm * 4)                                         # nn output blocks
    est += tm * 4                                               # row-max scratch
    vmem_limit = int(min(32 << 20, max(2 * est + (4 << 20), 8 << 20)))

    nn = pl.pallas_call(
        kernel,
        out_shape=jax.ShapeDtypeStruct((n_rows_p, 1), jnp.int32),
        grid=(n_rows_p // tm, nj),                              # reduction axis last
        in_specs=[pl.BlockSpec((tm, dp), lambda i, j: (i, 0)),
                  b_spec],
        out_specs=pl.BlockSpec((tm, 1), lambda i, j: (i, 0)),   # resident over j
        scratch_shapes=[pltpu.VMEM((tm, 1), jnp.float32)],      # running row max
        compiler_params=pltpu.CompilerParams(
            # i has no cross-step accumulator -> parallel (v7x megacore);
            # j carries the online argmax -> arbitrary.
            dimension_semantics=("parallel", "arbitrary"),
            vmem_limit_bytes=vmem_limit),
    )(a_p, b_p)
    return nn[:n_rows, 0]


def match_descriptors(d0_b: jnp.ndarray, d1_b: jnp.ndarray):
    """bf16 descriptors (N0, Dp), (N1, Dp) -> (nn0 (N0,), nn1 (N1,)) int32.

    Two one-directional passes (sim matmul recomputed; kernel is VPU-bound so
    this is cheap) so each pass keeps a megacore-shardable parallel axis."""
    nn0 = nearest_neighbors(d0_b, d1_b)
    nn1 = nearest_neighbors(d1_b, d0_b)
    return nn0, nn1


# -----------------------------------------------------------------------------
# BaseMatcher (JAX / Pallas port)
# -----------------------------------------------------------------------------

class BaseMatcher:
    DEFAULT_RANSAC_ITERS = 2000
    DEFAULT_RANSAC_CONF = 0.95
    DEFAULT_REPROJ_THRESH = 3

    def __init__(self, device="tpu", patch=8, desc_dim=32, **kwargs):
        self.device = device
        self.skip_ransac = kwargs.get("skip_ransac", False)
        self.ransac_iters = kwargs.get("ransac_iters", BaseMatcher.DEFAULT_RANSAC_ITERS)
        self.ransac_conf = kwargs.get("ransac_conf", BaseMatcher.DEFAULT_RANSAC_CONF)
        self.ransac_reproj_thresh = kwargs.get("ransac_reproj_thresh",
                                               BaseMatcher.DEFAULT_REPROJ_THRESH)
        self.patch = patch
        self.desc_dim = desc_dim
        # desc_dim zero-padded to 128 for lane-dense kernel output; K padded to
        # a multiple of 256 for clean MXU tiling.  Padding columns/rows of W are
        # zero so descriptors/similarities are unchanged; dict output is sliced
        # back to desc_dim.
        self.desc_pad = max(128, _round_up(desc_dim, 128))
        k = 3 * patch * patch
        self.k_pad = _round_up(k, 256)
        wkey = jax.random.PRNGKey(42)
        w = (jax.random.normal(wkey, (k, desc_dim), jnp.float32)
             / jnp.sqrt(jnp.float32(k)))
        self.w_proj = jnp.pad(w, ((0, self.k_pad - k),
                                  (0, self.desc_pad - desc_dim)))

    # ----- geometric helpers -------------------------------------------------
    def rescale_coords(self, pts, h_orig, w_orig, h_new, w_new):
        pts = jnp.asarray(pts, jnp.float32)
        normalized = pts / jnp.asarray([w_new, h_new], jnp.float32)
        return np.asarray(normalized * jnp.asarray([w_orig, h_orig], jnp.float32))

    @staticmethod
    def find_homography(points1, points2, reproj_thresh=DEFAULT_REPROJ_THRESH,
                        num_iters=DEFAULT_RANSAC_ITERS, ransac_conf=DEFAULT_RANSAC_CONF):
        # TODO(synk): cv2.findHomography with USAC_MAGSAC (iterative RANSAC over
        # dynamic-size point sets) has no clean Pallas equivalent; not ported.
        raise NotImplementedError

    def process_matches(self, matched_kpts0, matched_kpts1):
        if len(matched_kpts0) < 4 or self.skip_ransac:
            return (None, matched_kpts0, matched_kpts1)
        # RANSAC path not ported (see find_homography); behave like skip branch.
        return (None, matched_kpts0, matched_kpts1)

    def preprocess(self, img) -> Tuple[jnp.ndarray, Tuple[int, int]]:
        _, h, w = img.shape
        return img, (h, w)

    # ----- synthetic detector / descriptor / matcher -------------------------
    def _patches(self, img):
        """CHW image -> (N, C*P*P) patch matrix (device) + (N, 2) keypoints (host)."""
        img = jnp.asarray(img, jnp.float32)
        c, h, w = img.shape
        p = self.patch
        gh, gw = h // p, w // p
        n = gh * gw
        patches = (img[:, :gh * p, :gw * p]
                   .reshape(c, gh, p, gw, p)
                   .transpose(1, 3, 0, 2, 4)
                   .reshape(n, c * p * p))
        ys, xs = np.meshgrid(np.arange(gh), np.arange(gw), indexing="ij")
        kpts = np.stack([xs.reshape(-1) * p + (p - 1) / 2.0,
                         ys.reshape(-1) * p + (p - 1) / 2.0],
                        axis=-1).astype(np.float32)
        return patches, kpts

    def _forward(self, img0, img1):
        p0, kpts0 = self._patches(img0)
        p1, kpts1 = self._patches(img1)
        n0, n1 = p0.shape[0], p1.shape[0]

        # Single fused descriptor call for both images (W loaded once).
        patches = jnp.concatenate([p0, p1], axis=0)
        desc_b16 = compute_descriptors(patches, self.w_proj)
        d0b = desc_b16[:n0]
        d1b = desc_b16[n0:n0 + n1]
        # all_desc* reported at bf16 precision (f32-normalized then cast),
        # upcast + sliced in the wrapper per review (halves descriptor HBM write).
        d0f = d0b[:, :self.desc_dim].astype(jnp.float32)
        d1f = d1b[:, :self.desc_dim].astype(jnp.float32)

        # Pallas mutual-NN matching + on-device mutual mask (single host sync).
        nn0, nn1 = match_descriptors(d0b, d1b)
        mutual = jnp.take(nn1, nn0, axis=0) == jnp.arange(n0)

        jax.block_until_ready((d0f, d1f, nn0, mutual))
        nn0_np = np.asarray(nn0)
        mutual_np = np.asarray(mutual)
        d0_np = np.asarray(d0f)
        d1_np = np.asarray(d1f)

        matched_kpts0 = kpts0[mutual_np]
        matched_kpts1 = kpts1[nn0_np[mutual_np]]
        return matched_kpts0, matched_kpts1, kpts0, kpts1, d0_np, d1_np

    # ----- public forward, mirroring the torch module ------------------------
    def forward(self, img0, img1) -> dict:
        img0 = jnp.asarray(img0)
        img1 = jnp.asarray(img1)
        img0, _ = self.preprocess(img0)
        img1, _ = self.preprocess(img1)
        (matched_kpts0, matched_kpts1, all_kpts0, all_kpts1,
         all_desc0, all_desc1) = self._forward(img0, img1)
        H, inlier_kpts0, inlier_kpts1 = self.process_matches(matched_kpts0,
                                                             matched_kpts1)
        return {
            "num_inliers": len(inlier_kpts0),
            "H": H,
            "all_kpts0": all_kpts0,
            "all_kpts1": all_kpts1,
            "all_desc0": all_desc0,
            "all_desc1": all_desc1,
            "matched_kpts0": matched_kpts0,
            "matched_kpts1": matched_kpts1,
            "inlier_kpts0": inlier_kpts0,
            "inlier_kpts1": inlier_kpts1,
        }

    __call__ = forward

    def extract(self, img) -> dict:
        img = jnp.asarray(img)
        matched_kpts0, _, all_kpts0, _, all_desc0, _ = self._forward(img, img)
        kpts = matched_kpts0 if isinstance(self, EnsembleMatcher) else all_kpts0
        return {"all_kpts0": kpts, "all_desc0": all_desc0}


class EnsembleMatcher(BaseMatcher):
    def __init__(self, matchers=None, device="tpu", **kwargs):
        super().__init__(device, **kwargs)
        self.matchers = matchers if matchers is not None else []

    def _forward(self, img0, img1):
        all_matched_kpts0, all_matched_kpts1 = [], []
        for matcher in self.matchers:
            m0, m1, _, _, _, _ = matcher._forward(img0, img1)
            all_matched_kpts0.append(np.asarray(m0))
            all_matched_kpts1.append(np.asarray(m1))
        return (np.concatenate(all_matched_kpts0),
                np.concatenate(all_matched_kpts1),
                None, None, None, None)


# -----------------------------------------------------------------------------
# Demo
# -----------------------------------------------------------------------------

if __name__ == "__main__":
    key = jax.random.PRNGKey(0)
    k0, k1 = jax.random.split(key)
    # small CHW images, consistent with the (C x H x W) torch interface
    img0 = jax.random.uniform(k0, (3, 32, 32), jnp.float32)
    img1 = jax.random.uniform(k1, (3, 32, 32), jnp.float32)

    matcher = BaseMatcher(device="tpu", patch=8, desc_dim=32, skip_ransac=True)
    out = matcher(img0, img1)

    ens = EnsembleMatcher(matchers=[matcher, matcher], skip_ransac=True)
    ens_out = ens(img0, img1)

    assert out["all_kpts0"].shape == (16, 2)
    assert out["all_kpts1"].shape == (16, 2)
    assert out["all_desc0"].shape == (16, 32)
    assert out["all_desc1"].shape == (16, 32)
    assert out["matched_kpts0"].shape == out["matched_kpts1"].shape
    assert ens_out["matched_kpts0"].shape[0] == 2 * out["matched_kpts0"].shape[0]
    print("KERNEL_OK")
</pallas_src>

<mosaic_0001>
module attributes {stable_mosaic.version = 11 : i64} {
  func.func @_desc_kernel(%arg0: i32, %arg1: memref<32x256xbf16, #tpu.memory_space<vmem>>, %arg2: memref<256x128xbf16, #tpu.memory_space<vmem>>, %arg3: memref<32x128xbf16, #tpu.memory_space<vmem>>) attributes {dimension_semantics = [#tpu.dimension_semantics<parallel>], iteration_bounds = array<i64: 1>, scalar_prefetch = 0 : i64, scratch_operands = 0 : i64, tpu.core_type = #tpu.core_type<tc>, window_params = [{transform_indices = @transform_0, window_bounds = array<i64: 32, 256>}, {pipeline_mode = #tpu.pipeline_mode<synchronous>, transform_indices = @transform_1, window_bounds = array<i64: 256, 128>}, {transform_indices = @transform_2, window_bounds = array<i64: 32, 128>}]} {
    %c0 = arith.constant 0 : index
    %c0_0 = arith.constant 0 : index
    %0 = vector.load %arg1[%c0, %c0_0] : memref<32x256xbf16, #tpu.memory_space<vmem>>, vector<32x256xbf16>
    %c0_1 = arith.constant 0 : index
    %c0_2 = arith.constant 0 : index
    %1 = vector.load %arg2[%c0_1, %c0_2] : memref<256x128xbf16, #tpu.memory_space<vmem>>, vector<256x128xbf16>
    %cst = arith.constant dense<0.000000e+00> : vector<32x128xf32>
    %2 = tpu.matmul %0, %1, %cst {dimension_numbers = #tpu.dot_dimension_numbers<[1], [0], [0], [1], [0, 0, 1, 1], [], []>} : vector<32x256xbf16>, vector<256x128xbf16>, vector<32x128xf32> -> vector<32x128xf32>
    %3 = arith.mulf %2, %2 : vector<32x128xf32>
    %cst_3 = arith.constant dense<0.000000e+00> : vector<32xf32>
    %4 = vector.multi_reduction <add>, %3, %cst_3 [1] : vector<32x128xf32> to vector<32xf32>
    %5 = vector.shape_cast %4 : vector<32xf32> to vector<32x1xf32>
    %cst_4 = arith.constant 9.99999993E-9 : f32
    %6 = vector.broadcast %cst_4 : f32 to vector<32x1xf32>
    %7 = arith.addf %5, %6 : vector<32x1xf32>
    %8 = math.rsqrt %7 : vector<32x1xf32>
    %9 = vector.broadcast %8 : vector<32x1xf32> to vector<32x128xf32>
    %10 = arith.mulf %2, %9 : vector<32x128xf32>
    %11 = arith.truncf %10 : vector<32x128xf32> to vector<32x128xbf16>
    %c0_5 = arith.constant 0 : index
    %c0_6 = arith.constant 0 : index
    %12 = vector.load %arg3[%c0_5, %c0_6] : memref<32x128xbf16, #tpu.memory_space<vmem>>, vector<32x128xbf16>
    tpu.vector_store %arg3[%c0_5, %c0_6], %11 {strides = array<i32>} : memref<32x128xbf16, #tpu.memory_space<vmem>>, vector<32x128xbf16>,
    return
  }
  func.func @transform_0(%arg0: i32) -> (i32, i32) {
    %c0_i32 = arith.constant 0 : i32
    %c0_i32_0 = arith.constant 0 : i32
    return %arg0, %c0_i32 : i32, i32
  }
  func.func @transform_1(%arg0: i32) -> (i32, i32) {
    %c0_i32 = arith.constant 0 : i32
    %c0_i32_0 = arith.constant 0 : i32
    %c0_i32_1 = arith.constant 0 : i32
    return %c0_i32, %c0_i32_0 : i32, i32
  }
  func.func @transform_2(%arg0: i32) -> (i32, i32) {
    %c0_i32 = arith.constant 0 : i32
    %c0_i32_0 = arith.constant 0 : i32
    return %arg0, %c0_i32 : i32, i32
  }
}

</mosaic_0001>

<llo_original>
// kernel: tpu_custom_call.1
$region0: #{tpu_custom_call.1}
  #allocation0 [shape = 'u32[]', space=smem, size = 0x4, offset = 0x4, fixed_abs, tag = 'smem constant byte address 0x4 - core index']
  #allocation1 [shape = 'u32[72,128]{1,0:T(1,128)}', space=vmem, size = 0x9000, scoped, tag = 'internal scratch']
  %s0 = inlined_call_operand.hbm [shape: bf16[32,256], index: 0, kind: input, shape index: {}]
  %s1 = inlined_call_operand.hbm [shape: bf16[256,128], index: 1, kind: input, shape index: {}]
  %s2 = inlined_call_operand.hbm [shape: bf16[32,128], index: 2, kind: output, shape index: {}]
  %s3 = sld [smem:[#allocation0]]
  $region26: #{tpu_custom_call.1} parent=0
    _
  %s5 = ssub.s32 1, %s3
  %s6 = scalar_select 0, %s5, %s3
  $region1: #{tpu_custom_call.1} parent=0
    #allocation2 [shape = 'u8[16384]{0}', space=vmem, size = 0x4000, scoped, tag = 'input window, operand 0, single buffered']
    #allocation3 [shape = 's32[1]{0}', space=sflag, size = 0x4, scoped, tag = 'scoped memory for tpu_custom_call.1']
    #allocation4 [shape = 's32[1]{0}', space=sflag, size = 0x4, scoped, tag = 'scoped memory for tpu_custom_call.1']
    #allocation5 [shape = 'u8[65536]{0}', space=vmem, size = 0x10000, scoped, tag = 'input window, operand 1, single buffered']
    #allocation6 [shape = 's32[1]{0}', space=sflag, size = 0x4, scoped, tag = 'scoped memory for tpu_custom_call.1']
    #allocation7 [shape = 'u8[8192]{0}', space=vmem, size = 0x2000, scoped, tag = 'output window, operand 0, single buffered']
    %7 = vsyncpa [#allocation3], 0
    %8 = vsyncpa [#allocation6], 0
    %9 = vsyncpa [#allocation4], 0
    // Predicated region
    $region2: #{tpu_custom_call.1} parent=1 // pred_check
      _
    $region3: #{tpu_custom_call.1} parent=1 // pred_check_branch
      %11 = sbr.rel (0) target = $region5
    $region4: #{tpu_custom_call.1} parent=1 // pred_region
      %13 = vsyncadd [#allocation3], 0
      %s14 = sshll.u32 %s0, 4
      %s15 = int_to_ptr.hbm [resolvable:$true] %s14
      %s16 = sshll.u32 [#allocation2], 4
      %s17 = int_to_ptr.vmem [resolvable:$true] %s16
      %22 = dma.hbm_to_vmem [thread:$0]  %s15, 512, %s17, [#allocation3], 128, 128, 8
    $region5: #{tpu_custom_call.1} parent=1 // pred_fallthru
      _
    // Predicated region
    $region6: #{tpu_custom_call.1} parent=1 // pred_check
      _
    $region7: #{tpu_custom_call.1} parent=1 // pred_check_branch
      %24 = sbr.rel (0) target = $region9
    $region8: #{tpu_custom_call.1} parent=1 // pred_region
      %26 = vsyncadd [#allocation6], 0
      %s27 = sshll.u32 %s1, 4
      %s28 = int_to_ptr.hbm [resolvable:$true] %s27
      %s29 = sshll.u32 [#allocation5], 4
      %s30 = int_to_ptr.vmem [resolvable:$true] %s29
      %35 = dma.hbm_to_vmem [thread:$0]  %s28, 2048, %s30, [#allocation6], 64, 64, 4
    $region9: #{tpu_custom_call.1} parent=1 // pred_fallthru
      _
    // Predicated region
    $region10: #{tpu_custom_call.1} parent=1 // pred_check
      _
    $region11: #{tpu_custom_call.1} parent=1 // pred_check_branch
      %37 = sbr.rel (0) target = $region13
    $region12: #{tpu_custom_call.1} parent=1 // pred_region
      %39 = dma.done [#allocation3], 512
    $region13: #{tpu_custom_call.1} parent=1 // pred_fallthru
      _
    // Predicated region
    $region14: #{tpu_custom_call.1} parent=1 // pred_check
      _
    $region15: #{tpu_custom_call.1} parent=1 // pred_check_branch
      %41 = sbr.rel (0) target = $region17
    $region16: #{tpu_custom_call.1} parent=1 // pred_region
      %43 = dma.done [#allocation6], 2048
    $region17: #{tpu_custom_call.1} parent=1 // pred_fallthru
      _
    %v44 = vld [vmem:[#allocation2] sm:$0xff]
    %v45 = vld [vmem:[#allocation2 + $0x8] sm:$0xff]
    %v46 = vld [vmem:[#allocation2 + $0x10] sm:$0xff]
    %v47 = vld [vmem:[#allocation2 + $0x18] sm:$0xff]
    %v48 = vld [vmem:[#allocation5] sm:$0xf]
    %v49 = vld [vmem:[#allocation5 + $0x4] sm:$0xf]
    %v50 = vld [vmem:[#allocation5 + $0x8] sm:$0xf]
    %v51 = vld [vmem:[#allocation5 + $0xc] sm:$0xf]
    %v52 = vld [vmem:[#allocation5 + $0x10] sm:$0xf]
    %v53 = vld [vmem:[#allocation5 + $0x14] sm:$0xf]
    %v54 = vld [vmem:[#allocation5 + $0x18] sm:$0xf]
    %v55 = vld [vmem:[#allocation5 + $0x1c] sm:$0xf]
    %v56 = vld [vmem:[#allocation5 + $0x20] sm:$0xf]
    %v57 = vld [vmem:[#allocation5 + $0x24] sm:$0xf]
    %v58 = vld [vmem:[#allocation5 + $0x28] sm:$0xf]
    %v59 = vld [vmem:[#allocation5 + $0x2c] sm:$0xf]
    %v60 = vld [vmem:[#allocation5 + $0x30] sm:$0xf]
    %v61 = vld [vmem:[#allocation5 + $0x34] sm:$0xf]
    %v62 = vld [vmem:[#allocation5 + $0x38] sm:$0xf]
    %v63 = vld [vmem:[#allocation5 + $0x3c] sm:$0xf]
    %v64 = vld [vmem:[#allocation5 + $0x40] sm:$0xf]
    %v65 = vld [vmem:[#allocation5 + $0x44] sm:$0xf]
    %v66 = vld [vmem:[#allocation5 + $0x48] sm:$0xf]
    %v67 = vld [vmem:[#allocation5 + $0x4c] sm:$0xf]
    %v68 = vld [vmem:[#allocation5 + $0x50] sm:$0xf]
    %v69 = vld [vmem:[#allocation5 + $0x54] sm:$0xf]
    %v70 = vld [vmem:[#allocation5 + $0x58] sm:$0xf]
    %v71 = vld [vmem:[#allocation5 + $0x5c] sm:$0xf]
    %v72 = vld [vmem:[#allocation5 + $0x60] sm:$0xf]
    %v73 = vld [vmem:[#allocation5 + $0x64] sm:$0xf]
    %v74 = vld [vmem:[#allocation5 + $0x68] sm:$0xf]
    %v75 = vld [vmem:[#allocation5 + $0x6c] sm:$0xf]
    %v76 = vld [vmem:[#allocation5 + $0x70] sm:$0xf]
    %v77 = vld [vmem:[#allocation5 + $0x74] sm:$0xf]
    %v78 = vld [vmem:[#allocation5 + $0x78] sm:$0xf]
    %v79 = vld [vmem:[#allocation5 + $0x7c] sm:$0xf]
    %v84 = vunpack.c.l.b16 %v44
    %v85 = vunpack.c.h.b16 %v44
    %v86 = vunpack.c.l.b16 %v45
    %v87 = vunpack.c.h.b16 %v45
    %v88 = vunpack.c.l.b16 %v46
    %v89 = vunpack.c.h.b16 %v46
    %v90 = vunpack.c.l.b16 %v47
    %v91 = vunpack.c.h.b16 %v47
    %v92 = vpack.c.b16 %v86, %v84
    %v93 = vpack.c.b16 %v87, %v85
    %v94 = vpack.c.b16 %v90, %v88
    %v95 = vpack.c.b16 %v91, %v89
    %v132 = vunpack.c.l.b16 %v48
    %v133 = vunpack.c.l.b16 %v49
    %v134 = vunpack.c.l.b16 %v50
    %v135 = vunpack.c.l.b16 %v51
    %v136 = vunpack.c.l.b16 %v52
    %v137 = vunpack.c.l.b16 %v53
    %v138 = vunpack.c.l.b16 %v54
    %v139 = vunpack.c.l.b16 %v55
    %v140 = vunpack.c.l.b16 %v56
    %v141 = vunpack.c.l.b16 %v57
    %v142 = vunpack.c.l.b16 %v58
    %v143 = vunpack.c.l.b16 %v59
    %v144 = vunpack.c.l.b16 %v60
    %v145 = vunpack.c.l.b16 %v61
    %v146 = vunpack.c.l.b16 %v62
    %v147 = vunpack.c.l.b16 %v63
    %v148 = vunpack.c.l.b16 %v64
    %v149 = vunpack.c.l.b16 %v65
    %v150 = vunpack.c.l.b16 %v66
    %v151 = vunpack.c.l.b16 %v67
    %v152 = vunpack.c.l.b16 %v68
    %v153 = vunpack.c.l.b16 %v69
    %v154 = vunpack.c.l.b16 %v70
    %v155 = vunpack.c.l.b16 %v71
    %v156 = vunpack.c.l.b16 %v72
    %v157 = vunpack.c.l.b16 %v73
    %v158 = vunpack.c.l.b16 %v74
    %v159 = vunpack.c.l.b16 %v75
    %v160 = vunpack.c.l.b16 %v76
    %v161 = vunpack.c.l.b16 %v77
    %v162 = vunpack.c.l.b16 %v78
    %v163 = vunpack.c.l.b16 %v79
    %v164 = vpack.c.b16 %v133, %v132
    %v165 = vpack.c.b16 %v135, %v134
    %v166 = vpack.c.b16 %v137, %v136
    %v167 = vpack.c.b16 %v139, %v138
    %v168 = vpack.c.b16 %v141, %v140
    %v169 = vpack.c.b16 %v143, %v142
    %v170 = vpack.c.b16 %v145, %v144
    %v171 = vpack.c.b16 %v147, %v146
    %v172 = vpack.c.b16 %v149, %v148
    %v173 = vpack.c.b16 %v151, %v150
    %v174 = vpack.c.b16 %v153, %v152
    %v175 = vpack.c.b16 %v155, %v154
    %v176 = vpack.c.b16 %v157, %v156
    %v177 = vpack.c.b16 %v159, %v158
    %v178 = vpack.c.b16 %v161, %v160
    %v179 = vpack.c.b16 %v163, %v162
    %196 = vmatpush.bf16.msra.mxu0 %v171
    %197 = vmatpush.bf16.msra.mxu0 %v170
    %198 = vmatpush.bf16.msra.mxu0 %v169
    %199 = vmatpush.bf16.msra.mxu0 %v168
    %200 = vmatpush.bf16.msra.mxu0 %v167
    %201 = vmatpush.bf16.msra.mxu0 %v166
    %202 = vmatpush.bf16.msra.mxu0 %v165
    %203 = vmatpush.bf16.msra.mxu0 %v164
    %204 = vmatmul.bf16.gmra.mxu0 %v92
    %v205 = vpop.f32.mrf.mxu0
    %v206 = vadd.f32 0.0, %v205
    %v207 = vpop.f32.mrf.mxu0
    %v208 = vadd.f32 0.0, %v207
    %209 = vmatmul.bf16.gmra.mxu0 %v94
    %v210 = vpop.f32.mrf.mxu0
    %v211 = vadd.f32 0.0, %v210
    %v212 = vpop.f32.mrf.mxu0
    %v213 = vadd.f32 0.0, %v212
    %214 = vdwg.mxu0
    %215 = vmatpush.bf16.msra.mxu0 %v179
    %216 = vmatpush.bf16.msra.mxu0 %v178
    %217 = vmatpush.bf16.msra.mxu0 %v177
    %218 = vmatpush.bf16.msra.mxu0 %v176
    %219 = vmatpush.bf16.msra.mxu0 %v175
    %220 = vmatpush.bf16.msra.mxu0 %v174
    %221 = vmatpush.bf16.msra.mxu0 %v173
    %222 = vmatpush.bf16.msra.mxu0 %v172
    %223 = vmatmul.bf16.gmra.mxu0 %v93
    %v224 = vpop.f32.mrf.mxu0
    %v225 = vadd.f32 %v206, %v224
    %v226 = vpop.f32.mrf.mxu0
    %v227 = vadd.f32 %v208, %v226
    %228 = vmatmul.bf16.gmra.mxu0 %v95
    %v229 = vpop.f32.mrf.mxu0
    %v230 = vadd.f32 %v211, %v229
    %v231 = vpop.f32.mrf.mxu0
    %v232 = vadd.f32 %v213, %v231
    %233 = vdwg.mxu0
    %v234 = vmul.f32 %v225, %v225
    %v235 = vmul.f32 %v227, %v227
    %v236 = vmul.f32 %v230, %v230
    %v237 = vmul.f32 %v232, %v232
    %238 = vadd.xlane.f32.xlu0 %v234
    %v239 = vpop.xlane.xlu0 %238
    %240 = vadd.xlane.f32.xlu0 %v235
    %v241 = vpop.xlane.xlu0 %240
    %242 = vadd.xlane.f32.xlu0 %v236
    %v243 = vpop.xlane.xlu0 %242
    %244 = vadd.xlane.f32.xlu0 %v237
    %v245 = vpop.xlane.xlu0 %244
    %v246 = vadd.f32 %v239, 1e-08
    %v247 = vadd.f32 %v241, 1e-08
    %v248 = vadd.f32 %v243, 1e-08
    %v249 = vadd.f32 %v245, 1e-08
    %v250 = vrsqrt.pop %v246
    %v251 = vmul.f32 %v250, %v246
    %v252 = vmul.f32 %v251, %v250
    %v253 = vmul.f32 0.5, %v252
    %v254 = vsub.f32 1.5, %v253
    %v255 = vmul.f32 %v250, %v254
    %vm256 = vweird.f32 %v246
    %vm257 = vweird.f32 %v250
    %vm258 = vmor %vm256, %vm257
    %v259 = vsel %vm258, %v250, %v255
    %v260 = vrsqrt.pop %v247
    %v261 = vmul.f32 %v260, %v247
    %v262 = vmul.f32 %v261, %v260
    %v263 = vmul.f32 0.5, %v262
    %v264 = vsub.f32 1.5, %v263
    %v265 = vmul.f32 %v260, %v264
    %vm266 = vweird.f32 %v247
    %vm267 = vweird.f32 %v260
    %vm268 = vmor %vm266, %vm267
    %v269 = vsel %vm268, %v260, %v265
    %v270 = vrsqrt.pop %v248
    %v271 = vmul.f32 %v270, %v248
    %v272 = vmul.f32 %v271, %v270
    %v273 = vmul.f32 0.5, %v272
    %v274 = vsub.f32 1.5, %v273
    %v275 = vmul.f32 %v270, %v274
    %vm276 = vweird.f32 %v248
    %vm277 = vweird.f32 %v270
    %vm278 = vmor %vm276, %vm277
    %v279 = vsel %vm278, %v270, %v275
    %v280 = vrsqrt.pop %v249
    %v281 = vmul.f32 %v280, %v249
    %v282 = vmul.f32 %v281, %v280
    %v283 = vmul.f32 0.5, %v282
    %v284 = vsub.f32 1.5, %v283
    %v285 = vmul.f32 %v280, %v284
    %vm286 = vweird.f32 %v249
    %vm287 = vweird.f32 %v280
    %vm288 = vmor %vm286, %vm287
    %v289 = vsel %vm288, %v280, %v285
    %v290 = vmul.f32 %v225, %v259
    %v291 = vmul.f32 %v227, %v269
    %v292 = vmul.f32 %v230, %v279
    %v293 = vmul.f32 %v232, %v289
    %v294 = vpack.c.bf16 %v290, %v290
    %v295 = vpack.c.bf16 %v291, %v291
    %v296 = vpack.c.bf16 %v292, %v292
    %v297 = vpack.c.bf16 %v293, %v293
    %298 = vst [vmem:[#allocation7] sm:$0xf] %v294
    %299 = vst [vmem:[#allocation7 + $0x4] sm:$0xf] %v295
    %300 = vst [vmem:[#allocation7 + $0x8] sm:$0xf] %v296
    %301 = vst [vmem:[#allocation7 + $0xc] sm:$0xf] %v297
    // Predicated region
    $region18: #{tpu_custom_call.1} parent=1 // pred_check
      _
    $region19: #{tpu_custom_call.1} parent=1 // pred_check_branch
      %303 = sbr.rel (0) target = $region21
    $region20: #{tpu_custom_call.1} parent=1 // pred_region
      %305 = vsyncadd [#allocation4], 0
      %s306 = sshll.u32 [#allocation7], 4
      %s307 = int_to_ptr.vmem [resolvable:$true] %s306
      %s308 = sshll.u32 %s2, 4
      %s309 = int_to_ptr.hbm [resolvable:$true] %s308
      %314 = dma.vmem_to_hbm [thread:$0]  %s307, 256, %s309, [#allocation4], 64, 64, 4
    $region21: #{tpu_custom_call.1} parent=1 // pred_fallthru
      _
    // Predicated region
    $region22: #{tpu_custom_call.1} parent=1 // pred_check
      _
    $region23: #{tpu_custom_call.1} parent=1 // pred_check_branch
      %316 = sbr.rel (0) target = $region25
    $region24: #{tpu_custom_call.1} parent=1 // pred_region
      %318 = dma.done [#allocation4], 256
    $region25: #{tpu_custom_call.1} parent=1 // pred_fallthru
      _
    %319 = vsyncpa [#allocation3], 1
    %320 = vsyncpa [#allocation6], 1
    %321 = vsyncpa [#allocation4], 1

</llo_original>
